<compile_context>
chip_gen: v7x
topology: tpu7x:2x2x1
jax: 0.10.0
libtpu: 0.0.40
codegen_flags: <defaults>
</compile_context>

<pallas_src>
import functools

import jax
import jax.numpy as jnp
from jax.experimental import pallas as pl
from jax.experimental.pallas import tpu as pltpu

_LANE = 128
_SUBLANE = 8


def _round_up(x, m):
    return (x + m - 1) // m * m


def _logits_kernel(x_ref, w_ref, b_ref, logits_ref, *, mxu_dtype):
    """Inference path: logits = x @ W.T + b (no softmax / loss work)."""
    xm = x_ref[...]
    if xm.dtype != jnp.dtype(mxu_dtype):          # no-op when embeds arrive in bf16
        xm = xm.astype(mxu_dtype)
    logits = jax.lax.dot_general(
        xm, w_ref[...],                            # W untransposed: contract H with H
        dimension_numbers=(((1,), (1,)), ((), ())),
        preferred_element_type=jnp.float32,
    ) + b_ref[...]
    logits_ref[...] = logits.astype(logits_ref.dtype)


def _logits_loss_kernel(x_ref, w_ref, b_ref, sim_ref, y_ref,
                        logits_ref, perrow_ref,
                        *, n_rows, n_classes, mxu_dtype):
    """Fused linear + masked log_softmax + similarity-weighted per-row loss.

    x_ref      : (TB, H)          f32/bf16  audio embeddings (row block)
    w_ref      : (C_pad, H)       mxu_dtype linear weight, PyTorch layout, zero-padded
    b_ref      : (1, C_pad)       f32       linear bias, zero-padded
    sim_ref    : (C_pad, C_pad)   f32       similarity matrix, zero-padded
    y_ref      : (TB, 1)          i32       targets (row block)
    logits_ref : (TB, C_pad)      f32/bf16  output logits (lane-dense)
    perrow_ref : (TB, 1)          f32       per-row sum(logp*sim[y]); 0 for pad rows
    """
    i = pl.program_id(0)
    tb, c_pad = logits_ref.shape

    # ---- linear layer on the MXU (bf16 operands, f32 accumulate) ----
    xm = x_ref[...]
    if xm.dtype != jnp.dtype(mxu_dtype):
        xm = xm.astype(mxu_dtype)
    logits = jax.lax.dot_general(
        xm, w_ref[...],
        dimension_numbers=(((1,), (1,)), ((), ())),
        preferred_element_type=jnp.float32,
    ) + b_ref[...]
    logits_ref[...] = logits.astype(logits_ref.dtype)

    # ---- log_softmax over the real classes (padded lanes masked out) ----
    # NOTE: padded-lane correctness relies on (a) a FINITE mask value (-1e30,
    # not -inf, so exp/logp stay finite) and (b) sim being ZERO-padded so that
    # logp_pad * sim_pad == 0 contributes nothing to per_row.
    col_ids = jax.lax.broadcasted_iota(jnp.int32, (tb, c_pad), 1)
    masked = jnp.where(col_ids < n_classes, logits, jnp.float32(-1e30))
    m = jnp.max(masked, axis=-1, keepdims=True)
    shifted = masked - m
    lse = jnp.log(jnp.sum(jnp.exp(shifted), axis=-1, keepdims=True))
    logp = shifted - lse                                         # (tb, c_pad) f32

    # ---- in-kernel gather of similarity rows: one_hot(y) @ sim (MXU) ----
    onehot = (col_ids == y_ref[...]).astype(jnp.float32)         # (tb, c_pad)
    sim_rows = jnp.dot(onehot, sim_ref[...],
                       preferred_element_type=jnp.float32)       # (tb, c_pad)

    per_row = jnp.sum(logp * sim_rows, axis=-1, keepdims=True)   # (tb, 1)

    # rows beyond the true batch (batch zero-padded up to the row block) -> 0,
    # so the wrapper's sum/mean over real rows is unaffected.
    row_ids = i * tb + jax.lax.broadcasted_iota(jnp.int32, (tb, 1), 0)
    perrow_ref[...] = jnp.where(row_ids < n_rows, per_row, 0.0)


def clap_classifier_forward(embeds, weight, bias, similarity_matrix, y=None,
                            *, mxu_dtype=jnp.bfloat16, logits_dtype=jnp.float32,
                            row_block=2048):
    """Mirrors CLAPClassifier.forward *after* the CLAP encoder.

    embeds            : (B, 512) f32 or bf16 -- stands in for clap(...).audio_embeds
                        (bf16 input avoids any in-kernel cast and halves its DMA)
    weight            : (C, 512)             -- nn.Linear weight (PyTorch layout)
    bias              : (C,)
    similarity_matrix : (C, C)
    y                 : (B,) int or None

    Returns logits (B, C) if y is None, else (loss, logits).
    """
    embeds = jnp.asarray(embeds)
    weight = jnp.asarray(weight)
    bias = jnp.asarray(bias, jnp.float32)

    B, H = embeds.shape
    C = weight.shape[0]
    C_pad = _round_up(C, _LANE)          # lane-dense class dim (do NOT pad to 256)

    # Row tiling: single full block for small batches, fixed row blocks above.
    # row_block=2048: ~6-11 MiB total VMEM -> inside the 32 MiB scoped default
    # on v5e/v6e/v7x.  If you raise it past ~4096, also set vmem_limit_bytes.
    if _round_up(B, _SUBLANE) <= row_block:
        TB = _round_up(B, _SUBLANE)
    else:
        TB = row_block
    B_pad = _round_up(B, TB)
    num_blocks = B_pad // TB

    # Weight cast to MXU dtype once here (amortized param-init cost) + zero-pad.
    w_p = weight if weight.dtype == jnp.dtype(mxu_dtype) else weight.astype(mxu_dtype)
    if C_pad != C:
        w_p = jnp.zeros((C_pad, H), mxu_dtype).at[:C].set(w_p)
    b_p = bias if C_pad == C else jnp.zeros((C_pad,), jnp.float32).at[:C].set(bias)
    b_p = b_p.reshape(1, C_pad)
    # Embeddings keep their incoming dtype (no extra wrapper cast / HBM round trip).
    x_p = embeds if B_pad == B else jnp.zeros((B_pad, H), embeds.dtype).at[:B].set(embeds)

    x_itemsize = jnp.dtype(x_p.dtype).itemsize
    w_itemsize = jnp.dtype(w_p.dtype).itemsize
    o_itemsize = jnp.dtype(logits_dtype).itemsize

    x_spec = pl.BlockSpec((TB, H), lambda i: (i, 0))
    # Grid-invariant operands: single-buffered (no wasted second VMEM copy).
    w_spec = pl.BlockSpec((C_pad, H), lambda i: (0, 0), pipeline_mode=pl.Buffered(1))
    b_spec = pl.BlockSpec((1, C_pad), lambda i: (0, 0), pipeline_mode=pl.Buffered(1))
    logits_spec = pl.BlockSpec((TB, C_pad), lambda i: (i, 0))

    if y is None:
        # Inference: logits only — skip all softmax / loss work and the sim DMA.
        cost = pl.CostEstimate(
            flops=2 * B_pad * H * C_pad,
            transcendentals=0,
            bytes_accessed=(B_pad * H * x_itemsize + C_pad * H * w_itemsize
                            + C_pad * 4 + B_pad * C_pad * o_itemsize),
        )
        logits_pad = pl.pallas_call(
            functools.partial(_logits_kernel, mxu_dtype=mxu_dtype),
            out_shape=jax.ShapeDtypeStruct((B_pad, C_pad), logits_dtype),
            grid_spec=pltpu.PrefetchScalarGridSpec(
                num_scalar_prefetch=0,
                grid=(num_blocks,),
                in_specs=[x_spec, w_spec, b_spec],
                out_specs=logits_spec,
            ),
            compiler_params=pltpu.CompilerParams(
                dimension_semantics=("parallel",)),   # row blocks shard across cores
            cost_estimate=cost,
        )(x_p, w_p, b_p)
        return logits_pad[:B, :C]

    # Training: fused logits + per-row similarity-weighted log-prob sums.
    sim_p = jnp.asarray(similarity_matrix, jnp.float32)
    if C_pad != C:
        sim_p = jnp.zeros((C_pad, C_pad), jnp.float32).at[:C, :C].set(sim_p)
    y_p = jnp.zeros((B_pad, 1), jnp.int32).at[:B, 0].set(jnp.asarray(y, jnp.int32))

    cost = pl.CostEstimate(
        flops=2 * B_pad * H * C_pad + 2 * B_pad * C_pad * C_pad,
        transcendentals=B_pad * C_pad + B_pad,
        bytes_accessed=(B_pad * H * x_itemsize + C_pad * H * w_itemsize
                        + C_pad * 4 + C_pad * C_pad * 4 + B_pad * 4
                        + B_pad * C_pad * o_itemsize + B_pad * 4),
    )
    logits_pad, per_row = pl.pallas_call(
        functools.partial(_logits_loss_kernel, n_rows=B, n_classes=C,
                          mxu_dtype=mxu_dtype),
        out_shape=(
            jax.ShapeDtypeStruct((B_pad, C_pad), logits_dtype),
            jax.ShapeDtypeStruct((B_pad, 1), jnp.float32),
        ),
        grid_spec=pltpu.PrefetchScalarGridSpec(
            num_scalar_prefetch=0,
            grid=(num_blocks,),
            in_specs=[x_spec, w_spec, b_spec,
                      pl.BlockSpec((C_pad, C_pad), lambda i: (0, 0),
                                   pipeline_mode=pl.Buffered(1)),
                      pl.BlockSpec((TB, 1), lambda i: (i, 0))],
            out_specs=(
                logits_spec,
                pl.BlockSpec((TB, 1), lambda i: (i, 0)),   # disjoint per-block tiles
            ),
        ),
        compiler_params=pltpu.CompilerParams(
            dimension_semantics=("parallel",)),   # no serial accumulator anymore
        cost_estimate=cost,
    )(x_p, w_p, b_p, sim_p, y_p)

    # Final -mean over real rows (padded rows were written as exact zeros).
    loss = -(jnp.sum(per_row) / B)
    return loss, logits_pad[:B, :C]


def _reference(embeds, weight, bias, similarity_matrix, y, mxu_dtype=jnp.float32):
    """Pure-JAX reference of the PyTorch head (optionally at matched MXU precision)."""
    if mxu_dtype == jnp.float32:
        logits = jnp.dot(embeds.astype(jnp.float32), weight.T.astype(jnp.float32),
                         precision=jax.lax.Precision.HIGHEST) + bias
    else:
        logits = jnp.dot(embeds.astype(mxu_dtype), weight.T.astype(mxu_dtype),
                         preferred_element_type=jnp.float32) + bias
    logp = jax.nn.log_softmax(logits, axis=-1)
    sim_rows = similarity_matrix[y]
    loss = -jnp.mean(jnp.sum(logp * sim_rows, axis=1))
    return loss, logits


if __name__ == "__main__":
    key = jax.random.PRNGKey(0)
    k_emb, k_w, k_b, k_sim, k_y, k_emb2, k_y2 = jax.random.split(key, 7)

    B = 4            # batch of audio clips
    H = 512          # CLAP projection dim (fixed by the module: in_features=512)
    C = 16           # num_classes

    embeds = jax.random.normal(k_emb, (B, H), dtype=jnp.float32)
    weight = jax.random.normal(k_w, (C, H), dtype=jnp.float32) * 0.05
    bias = jax.random.normal(k_b, (C,), dtype=jnp.float32) * 0.01
    sim = jax.nn.softmax(jax.random.normal(k_sim, (C, C), dtype=jnp.float32), axis=-1)
    y = jax.random.randint(k_y, (B,), 0, C, dtype=jnp.int32)

    # --- training path (loss + logits), single row block, f32 embeds ---
    loss, logits = clap_classifier_forward(embeds, weight, bias, sim, y)
    jax.block_until_ready((loss, logits))

    ref_loss_mx, ref_logits_mx = _reference(embeds, weight, bias, sim, y,
                                            mxu_dtype=jnp.bfloat16)
    ref_loss_f32, ref_logits_f32 = _reference(embeds, weight, bias, sim, y)

    # tight check vs. a matched-precision (bf16-operand) reference
    assert jnp.allclose(logits, ref_logits_mx, atol=2e-3, rtol=2e-3), "logits mismatch"
    assert jnp.allclose(loss, ref_loss_mx, atol=2e-3, rtol=2e-3), "loss mismatch"
    # loose sanity check vs. the full-f32 reference
    assert jnp.allclose(logits, ref_logits_f32, atol=5e-2, rtol=5e-2), "logits drift"
    assert jnp.allclose(loss, ref_loss_f32, atol=5e-2, rtol=5e-2), "loss drift"

    # --- inference path (y=None): logits-only kernel ---
    logits_only = clap_classifier_forward(embeds, weight, bias, sim, None)
    jax.block_until_ready(logits_only)
    assert jnp.allclose(logits_only, ref_logits_mx, atol=2e-3, rtol=2e-3), \
        "inference logits mismatch"

    # --- larger batch with bf16 embeddings: exercises the row-block grid
    #     (3 parallel blocks at row_block=128), the no-cast bf16 DMA path,
    #     row masking, and the per-block partial-loss outputs ---
    B2 = 300
    embeds2 = jax.random.normal(k_emb2, (B2, H), dtype=jnp.float32).astype(jnp.bfloat16)
    y2 = jax.random.randint(k_y2, (B2,), 0, C, dtype=jnp.int32)
    loss2, logits2 = clap_classifier_forward(embeds2, weight, bias, sim, y2,
                                             row_block=128)
    jax.block_until_ready((loss2, logits2))
    ref_loss2, ref_logits2 = _reference(embeds2, weight, bias, sim, y2,
                                        mxu_dtype=jnp.bfloat16)
    assert jnp.allclose(logits2, ref_logits2, atol=2e-3, rtol=2e-3), "grid logits mismatch"
    assert jnp.allclose(loss2, ref_loss2, atol=2e-3, rtol=2e-3), "grid loss mismatch"

    print("KERNEL_OK")
</pallas_src>

<mosaic_0001>
module attributes {stable_mosaic.version = 11 : i64} {
  func.func @_logits_loss_kernel(%arg0: i32, %arg1: memref<8x512xf32, #tpu.memory_space<vmem>>, %arg2: memref<128x512xbf16, #tpu.memory_space<vmem>>, %arg3: memref<1x128xf32, #tpu.memory_space<vmem>>, %arg4: memref<128x128xf32, #tpu.memory_space<vmem>>, %arg5: memref<8x1xi32, #tpu.memory_space<vmem>>, %arg6: memref<8x128xf32, #tpu.memory_space<vmem>>, %arg7: memref<8x1xf32, #tpu.memory_space<vmem>>) attributes {dimension_semantics = [#tpu.dimension_semantics<parallel>], iteration_bounds = array<i64: 1>, scalar_prefetch = 0 : i64, scratch_operands = 0 : i64, tpu.core_type = #tpu.core_type<tc>, window_params = [{transform_indices = @transform_0, window_bounds = array<i64: 8, 512>}, {pipeline_mode = #tpu.pipeline_mode<synchronous>, transform_indices = @transform_1, window_bounds = array<i64: 128, 512>}, {pipeline_mode = #tpu.pipeline_mode<synchronous>, transform_indices = @transform_2, window_bounds = array<i64: 1, 128>}, {pipeline_mode = #tpu.pipeline_mode<synchronous>, transform_indices = @transform_3, window_bounds = array<i64: 128, 128>}, {transform_indices = @transform_4, window_bounds = array<i64: 8, 1>}, {transform_indices = @transform_5, window_bounds = array<i64: 8, 128>}, {transform_indices = @transform_6, window_bounds = array<i64: 8, 1>}]} {
    %c0 = arith.constant 0 : index
    %c0_0 = arith.constant 0 : index
    %0 = vector.load %arg1[%c0, %c0_0] : memref<8x512xf32, #tpu.memory_space<vmem>>, vector<8x512xf32>
    %1 = arith.truncf %0 : vector<8x512xf32> to vector<8x512xbf16>
    %c0_1 = arith.constant 0 : index
    %c0_2 = arith.constant 0 : index
    %2 = vector.load %arg2[%c0_1, %c0_2] : memref<128x512xbf16, #tpu.memory_space<vmem>>, vector<128x512xbf16>
    %cst = arith.constant dense<0.000000e+00> : vector<8x128xf32>
    %3 = tpu.matmul %1, %2, %cst {dimension_numbers = #tpu.dot_dimension_numbers<[1], [1], [0], [0], [0, 0, 1, 0], [], []>} : vector<8x512xbf16>, vector<128x512xbf16>, vector<8x128xf32> -> vector<8x128xf32>
    %c0_3 = arith.constant 0 : index
    %c0_4 = arith.constant 0 : index
    %4 = vector.load %arg3[%c0_3, %c0_4] : memref<1x128xf32, #tpu.memory_space<vmem>>, vector<1x128xf32>
    %5 = vector.broadcast %4 : vector<1x128xf32> to vector<8x128xf32>
    %6 = arith.addf %3, %5 : vector<8x128xf32>
    %c0_5 = arith.constant 0 : index
    %c0_6 = arith.constant 0 : index
    %7 = vector.load %arg6[%c0_5, %c0_6] : memref<8x128xf32, #tpu.memory_space<vmem>>, vector<8x128xf32>
    tpu.vector_store %arg6[%c0_5, %c0_6], %6 {strides = array<i32>} : memref<8x128xf32, #tpu.memory_space<vmem>>, vector<8x128xf32>,
    %8 = tpu.iota {dimensions = array<i32: 1>} : vector<8x128xi32>
    %c16_i32 = arith.constant 16 : i32
    %9 = vector.broadcast %c16_i32 : i32 to vector<8x128xi32>
    %10 = arith.cmpi slt, %8, %9 : vector<8x128xi32>
    %cst_7 = arith.constant -1.000000e+30 : f32
    %11 = vector.broadcast %cst_7 : f32 to vector<8x128xf32>
    %12 = arith.select %10, %6, %11 : vector<8x128xi1>, vector<8x128xf32>
    %cst_8 = arith.constant dense<0xFF800000> : vector<8xf32>
    %13 = vector.multi_reduction <maximumf>, %12, %cst_8 [1] : vector<8x128xf32> to vector<8xf32>
    %14 = vector.shape_cast %13 : vector<8xf32> to vector<8x1xf32>
    %15 = vector.broadcast %14 : vector<8x1xf32> to vector<8x128xf32>
    %16 = arith.subf %12, %15 : vector<8x128xf32>
    %17 = math.exp %16 : vector<8x128xf32>
    %cst_9 = arith.constant dense<0.000000e+00> : vector<8xf32>
    %18 = vector.multi_reduction <add>, %17, %cst_9 [1] : vector<8x128xf32> to vector<8xf32>
    %19 = vector.shape_cast %18 : vector<8xf32> to vector<8x1xf32>
    %20 = math.log %19 : vector<8x1xf32>
    %21 = vector.broadcast %20 : vector<8x1xf32> to vector<8x128xf32>
    %22 = arith.subf %16, %21 : vector<8x128xf32>
    %c0_10 = arith.constant 0 : index
    %c0_11 = arith.constant 0 : index
    %23 = vector.load %arg5[%c0_10, %c0_11] : memref<8x1xi32, #tpu.memory_space<vmem>>, vector<8x1xi32>
    %24 = vector.broadcast %23 : vector<8x1xi32> to vector<8x128xi32>
    %25 = arith.cmpi eq, %8, %24 : vector<8x128xi32>
    %26 = arith.extui %25 : vector<8x128xi1> to vector<8x128xi32>
    %27 = arith.sitofp %26 : vector<8x128xi32> to vector<8x128xf32>
    %c0_12 = arith.constant 0 : index
    %c0_13 = arith.constant 0 : index
    %28 = vector.load %arg4[%c0_12, %c0_13] : memref<128x128xf32, #tpu.memory_space<vmem>>, vector<128x128xf32>
    %cst_14 = arith.constant dense<0.000000e+00> : vector<8x128xf32>
    %29 = tpu.matmul %27, %28, %cst_14 {dimension_numbers = #tpu.dot_dimension_numbers<[1], [0], [0], [1], [0, 0, 1, 1], [], []>} : vector<8x128xf32>, vector<128x128xf32>, vector<8x128xf32> -> vector<8x128xf32>
    %30 = arith.mulf %22, %29 : vector<8x128xf32>
    %cst_15 = arith.constant dense<0.000000e+00> : vector<8xf32>
    %31 = vector.multi_reduction <add>, %30, %cst_15 [1] : vector<8x128xf32> to vector<8xf32>
    %32 = vector.shape_cast %31 : vector<8xf32> to vector<8x1xf32>
    %c8_i32 = arith.constant 8 : i32
    %33 = arith.muli %arg0, %c8_i32 : i32
    %34 = tpu.iota {dimensions = array<i32: 0>} : vector<8x1xi32>
    %35 = vector.broadcast %33 : i32 to vector<8x1xi32>
    %36 = arith.addi %35, %34 : vector<8x1xi32>
    %c4_i32 = arith.constant 4 : i32
    %37 = vector.broadcast %c4_i32 : i32 to vector<8x1xi32>
    %38 = arith.cmpi slt, %36, %37 : vector<8x1xi32>
    %cst_16 = arith.constant 0.000000e+00 : f32
    %39 = vector.broadcast %cst_16 : f32 to vector<8x1xf32>
    %40 = arith.select %38, %32, %39 : vector<8x1xi1>, vector<8x1xf32>
    %c0_17 = arith.constant 0 : index
    %c0_18 = arith.constant 0 : index
    %41 = vector.load %arg7[%c0_17, %c0_18] : memref<8x1xf32, #tpu.memory_space<vmem>>, vector<8x1xf32>
    tpu.vector_store %arg7[%c0_17, %c0_18], %40 {strides = array<i32>} : memref<8x1xf32, #tpu.memory_space<vmem>>, vector<8x1xf32>,
    return
  }
  func.func @transform_0(%arg0: i32) -> (i32, i32) {
    %c0_i32 = arith.constant 0 : i32
    %c0_i32_0 = arith.constant 0 : i32
    return %arg0, %c0_i32 : i32, i32
  }
  func.func @transform_1(%arg0: i32) -> (i32, i32) {
    %c0_i32 = arith.constant 0 : i32
    %c0_i32_0 = arith.constant 0 : i32
    %c0_i32_1 = arith.constant 0 : i32
    return %c0_i32, %c0_i32_0 : i32, i32
  }
  func.func @transform_2(%arg0: i32) -> (i32, i32) {
    %c0_i32 = arith.constant 0 : i32
    %c0_i32_0 = arith.constant 0 : i32
    %c0_i32_1 = arith.constant 0 : i32
    return %c0_i32, %c0_i32_0 : i32, i32
  }
  func.func @transform_3(%arg0: i32) -> (i32, i32) {
    %c0_i32 = arith.constant 0 : i32
    %c0_i32_0 = arith.constant 0 : i32
    %c0_i32_1 = arith.constant 0 : i32
    return %c0_i32, %c0_i32_0 : i32, i32
  }
  func.func @transform_4(%arg0: i32) -> (i32, i32) {
    %c0_i32 = arith.constant 0 : i32
    %c0_i32_0 = arith.constant 0 : i32
    return %arg0, %c0_i32 : i32, i32
  }
  func.func @transform_5(%arg0: i32) -> (i32, i32) {
    %c0_i32 = arith.constant 0 : i32
    %c0_i32_0 = arith.constant 0 : i32
    return %arg0, %c0_i32 : i32, i32
  }
  func.func @transform_6(%arg0: i32) -> (i32, i32) {
    %c0_i32 = arith.constant 0 : i32
    %c0_i32_0 = arith.constant 0 : i32
    return %arg0, %c0_i32 : i32, i32
  }
}

</mosaic_0001>

<llo_original>
// kernel: tpu_custom_call.1
$region0: #{tpu_custom_call.1}
  #allocation0 [shape = 'u32[]', space=smem, size = 0x4, offset = 0x4, fixed_abs, tag = 'smem constant byte address 0x4 - core index']
  #allocation1 [shape = 'u32[144,128]{1,0:T(1,128)}', space=vmem, size = 0x12000, scoped, tag = 'internal scratch']
  %s0 = inlined_call_operand.hbm [shape: f32[8,512], index: 0, kind: input, shape index: {}]
  %s1 = inlined_call_operand.hbm [shape: bf16[128,512], index: 1, kind: input, shape index: {}]
  %s2 = inlined_call_operand.vmem [shape: f32[1,128], index: 2, kind: input, shape index: {}]
  %s3 = inlined_call_operand.hbm [shape: f32[128,128], index: 3, kind: input, shape index: {}]
  %s4 = inlined_call_operand.vmem [shape: s32[8,1], index: 4, kind: input, shape index: {}]
  %s5 = inlined_call_operand.hbm [shape: f32[8,128], index: 5, kind: output, shape index: {0}]
  %s6 = inlined_call_operand.vmem [shape: f32[8,1], index: 6, kind: output, shape index: {1}]
  %7 = xla_tuple %s5, %s6
  %s8 = sld [smem:[#allocation0]]
  $region50: #{tpu_custom_call.1} parent=0
    _
  %s10 = ssub.s32 1, %s8
  %s11 = scalar_select 0, %s10, %s8
  $region1: #{tpu_custom_call.1} parent=0
    #allocation2 [shape = 'u8[16384]{0}', space=vmem, size = 0x4000, scoped, tag = 'input window, operand 0, single buffered']
    #allocation3 [shape = 's32[1]{0}', space=sflag, size = 0x4, scoped, tag = 'scoped memory for tpu_custom_call.1']
    #allocation4 [shape = 's32[1]{0}', space=sflag, size = 0x4, scoped, tag = 'scoped memory for tpu_custom_call.1']
    #allocation5 [shape = 'u8[131072]{0}', space=vmem, size = 0x20000, scoped, tag = 'input window, operand 1, single buffered']
    #allocation6 [shape = 's32[1]{0}', space=sflag, size = 0x4, scoped, tag = 'scoped memory for tpu_custom_call.1']
    #allocation7 [shape = 'u8[65536]{0}', space=vmem, size = 0x10000, scoped, tag = 'input window, operand 3, single buffered']
    #allocation8 [shape = 'u8[4096]{0}', space=vmem, size = 0x1000, scoped, tag = 'output window, operand 0, single buffered']
    %12 = vsyncpa [#allocation3], 0
    %13 = vsyncpa [#allocation6], 0
    %14 = vsyncpa [#allocation4], 0
    // Predicated region
    $region2: #{tpu_custom_call.1} parent=1 // pred_check
      _
    $region3: #{tpu_custom_call.1} parent=1 // pred_check_branch
      %16 = sbr.rel (0) target = $region5
    $region4: #{tpu_custom_call.1} parent=1 // pred_region
      %s18 = ssub.s32 512, 512
      %19 = vsyncadd [#allocation3], %s18
      %s21 = sshll.u32 [#allocation2], 4
      %s22 = int_to_ptr.vmem [resolvable:$true] %s21
      %24 = dma.hbm_to_vmem [thread:$0]  %s0, 512, %s22, [#allocation3]
    $region5: #{tpu_custom_call.1} parent=1 // pred_fallthru
      _
    // Predicated region
    $region6: #{tpu_custom_call.1} parent=1 // pred_check
      _
    $region7: #{tpu_custom_call.1} parent=1 // pred_check_branch
      %26 = sbr.rel (0) target = $region9
    $region8: #{tpu_custom_call.1} parent=1 // pred_region
      %s28 = ssub.s32 4096, 4096
      %29 = vsyncadd [#allocation6], %s28
      %s30 = sshll.u32 [#allocation5], 4
      %s31 = int_to_ptr.vmem [resolvable:$true] %s30
      %36 = dma.hbm_to_vmem [thread:$0]  %s1, 4096, %s31, [#allocation6], 256, 256, 16
    $region9: #{tpu_custom_call.1} parent=1 // pred_fallthru
      _
    // Predicated region
    $region10: #{tpu_custom_call.1} parent=1 // pred_check
      _
    $region11: #{tpu_custom_call.1} parent=1 // pred_check_branch
      %38 = sbr.rel (0) target = $region13
    $region12: #{tpu_custom_call.1} parent=1 // pred_region
      _
    $region13: #{tpu_custom_call.1} parent=1 // pred_fallthru
      _
    // Predicated region
    $region14: #{tpu_custom_call.1} parent=1 // pred_check
      _
    $region15: #{tpu_custom_call.1} parent=1 // pred_check_branch
      %40 = sbr.rel (0) target = $region17
    $region16: #{tpu_custom_call.1} parent=1 // pred_region
      %s42 = ssub.s32 2048, 2048
      %43 = vsyncadd [#allocation6], %s42
      %s44 = sshll.u32 [#allocation7], 4
      %s45 = int_to_ptr.vmem [resolvable:$true] %s44
      %50 = dma.hbm_to_vmem [thread:$0]  %s3, 2048, %s45, [#allocation6], 128, 128, 8
    $region17: #{tpu_custom_call.1} parent=1 // pred_fallthru
      _
    // Predicated region
    $region18: #{tpu_custom_call.1} parent=1 // pred_check
      _
    $region19: #{tpu_custom_call.1} parent=1 // pred_check_branch
      %52 = sbr.rel (0) target = $region21
    $region20: #{tpu_custom_call.1} parent=1 // pred_region
      _
    $region21: #{tpu_custom_call.1} parent=1 // pred_fallthru
      _
    // Predicated region
    $region22: #{tpu_custom_call.1} parent=1 // pred_check
      _
    $region23: #{tpu_custom_call.1} parent=1 // pred_check_branch
      %54 = sbr.rel (0) target = $region25
    $region24: #{tpu_custom_call.1} parent=1 // pred_region
      %55 = dma.done [#allocation3], 512
    $region25: #{tpu_custom_call.1} parent=1 // pred_fallthru
      _
    // Predicated region
    $region26: #{tpu_custom_call.1} parent=1 // pred_check
      _
    $region27: #{tpu_custom_call.1} parent=1 // pred_check_branch
      %57 = sbr.rel (0) target = $region29
    $region28: #{tpu_custom_call.1} parent=1 // pred_region
      %58 = dma.done [#allocation6], 4096
    $region29: #{tpu_custom_call.1} parent=1 // pred_fallthru
      _
    // Predicated region
    $region30: #{tpu_custom_call.1} parent=1 // pred_check
      _
    $region31: #{tpu_custom_call.1} parent=1 // pred_check_branch
      %60 = sbr.rel (0) target = $region33
    $region32: #{tpu_custom_call.1} parent=1 // pred_region
      %61 = dma.done [#allocation6], 2048
    $region33: #{tpu_custom_call.1} parent=1 // pred_fallthru
      _
    %v63 = vld [vmem:[#allocation2] sm:$0xff]
    %v64 = vld [vmem:[#allocation2 + $0x8] sm:$0xff]
    %v65 = vld [vmem:[#allocation2 + $0x10] sm:$0xff]
    %v66 = vld [vmem:[#allocation2 + $0x18] sm:$0xff]
    %v67 = vpack.c.bf16 %v63, %v63
    %v68 = vpack.c.bf16 %v64, %v64
    %v69 = vpack.c.bf16 %v65, %v65
    %v70 = vpack.c.bf16 %v66, %v66
    %v71 = vld [vmem:[#allocation5] sm:$0xff]
    %v72 = vld [vmem:[#allocation5 + $0x8] sm:$0xff]
    %v73 = vld [vmem:[#allocation5 + $0x10] sm:$0xff]
    %v74 = vld [vmem:[#allocation5 + $0x18] sm:$0xff]
    %v75 = vld [vmem:[#allocation5 + $0x20] sm:$0xff]
    %v76 = vld [vmem:[#allocation5 + $0x28] sm:$0xff]
    %v77 = vld [vmem:[#allocation5 + $0x30] sm:$0xff]
    %v78 = vld [vmem:[#allocation5 + $0x38] sm:$0xff]
    %v79 = vld [vmem:[#allocation5 + $0x40] sm:$0xff]
    %v80 = vld [vmem:[#allocation5 + $0x48] sm:$0xff]
    %v81 = vld [vmem:[#allocation5 + $0x50] sm:$0xff]
    %v82 = vld [vmem:[#allocation5 + $0x58] sm:$0xff]
    %v83 = vld [vmem:[#allocation5 + $0x60] sm:$0xff]
    %v84 = vld [vmem:[#allocation5 + $0x68] sm:$0xff]
    %v85 = vld [vmem:[#allocation5 + $0x70] sm:$0xff]
    %v86 = vld [vmem:[#allocation5 + $0x78] sm:$0xff]
    %v87 = vld [vmem:[#allocation5 + $0x80] sm:$0xff]
    %v88 = vld [vmem:[#allocation5 + $0x88] sm:$0xff]
    %v89 = vld [vmem:[#allocation5 + $0x90] sm:$0xff]
    %v90 = vld [vmem:[#allocation5 + $0x98] sm:$0xff]
    %v91 = vld [vmem:[#allocation5 + $0xa0] sm:$0xff]
    %v92 = vld [vmem:[#allocation5 + $0xa8] sm:$0xff]
    %v93 = vld [vmem:[#allocation5 + $0xb0] sm:$0xff]
    %v94 = vld [vmem:[#allocation5 + $0xb8] sm:$0xff]
    %v95 = vld [vmem:[#allocation5 + $0xc0] sm:$0xff]
    %v96 = vld [vmem:[#allocation5 + $0xc8] sm:$0xff]
    %v97 = vld [vmem:[#allocation5 + $0xd0] sm:$0xff]
    %v98 = vld [vmem:[#allocation5 + $0xd8] sm:$0xff]
    %v99 = vld [vmem:[#allocation5 + $0xe0] sm:$0xff]
    %v100 = vld [vmem:[#allocation5 + $0xe8] sm:$0xff]
    %v101 = vld [vmem:[#allocation5 + $0xf0] sm:$0xff]
    %v102 = vld [vmem:[#allocation5 + $0xf8] sm:$0xff]
    %v103 = vld [vmem:[%s2] sm:$0x1]
    %v105 = vlaneseq
    %v106 = vshrl.u32 %v105, 7
    %v107 = vsub.s32 0, %v106
    %v108 = vrot.slane %v103, %v107
    %v142 = vunpack.c.l.b16 %v71
    %v143 = vunpack.c.h.b16 %v71
    %v144 = vunpack.c.l.b16 %v72
    %v145 = vunpack.c.h.b16 %v72
    %v146 = vunpack.c.l.b16 %v73
    %v147 = vunpack.c.h.b16 %v73
    %v148 = vunpack.c.l.b16 %v74
    %v149 = vunpack.c.h.b16 %v74
    %v150 = vunpack.c.l.b16 %v75
    %v151 = vunpack.c.h.b16 %v75
    %v152 = vunpack.c.l.b16 %v76
    %v153 = vunpack.c.h.b16 %v76
    %v154 = vunpack.c.l.b16 %v77
    %v155 = vunpack.c.h.b16 %v77
    %v156 = vunpack.c.l.b16 %v78
    %v157 = vunpack.c.h.b16 %v78
    %v158 = vunpack.c.l.b16 %v79
    %v159 = vunpack.c.h.b16 %v79
    %v160 = vunpack.c.l.b16 %v80
    %v161 = vunpack.c.h.b16 %v80
    %v162 = vunpack.c.l.b16 %v81
    %v163 = vunpack.c.h.b16 %v81
    %v164 = vunpack.c.l.b16 %v82
    %v165 = vunpack.c.h.b16 %v82
    %v166 = vunpack.c.l.b16 %v83
    %v167 = vunpack.c.h.b16 %v83
    %v168 = vunpack.c.l.b16 %v84
    %v169 = vunpack.c.h.b16 %v84
    %v170 = vunpack.c.l.b16 %v85
    %v171 = vunpack.c.h.b16 %v85
    %v172 = vunpack.c.l.b16 %v86
    %v173 = vunpack.c.h.b16 %v86
    %v174 = vunpack.c.l.b16 %v87
    %v175 = vunpack.c.h.b16 %v87
    %v176 = vunpack.c.l.b16 %v88
    %v177 = vunpack.c.h.b16 %v88
    %v178 = vunpack.c.l.b16 %v89
    %v179 = vunpack.c.h.b16 %v89
    %v180 = vunpack.c.l.b16 %v90
    %v181 = vunpack.c.h.b16 %v90
    %v182 = vunpack.c.l.b16 %v91
    %v183 = vunpack.c.h.b16 %v91
    %v184 = vunpack.c.l.b16 %v92
    %v185 = vunpack.c.h.b16 %v92
    %v186 = vunpack.c.l.b16 %v93
    %v187 = vunpack.c.h.b16 %v93
    %v188 = vunpack.c.l.b16 %v94
    %v189 = vunpack.c.h.b16 %v94
    %v190 = vunpack.c.l.b16 %v95
    %v191 = vunpack.c.h.b16 %v95
    %v192 = vunpack.c.l.b16 %v96
    %v193 = vunpack.c.h.b16 %v96
    %v194 = vunpack.c.l.b16 %v97
    %v195 = vunpack.c.h.b16 %v97
    %v196 = vunpack.c.l.b16 %v98
    %v197 = vunpack.c.h.b16 %v98
    %v198 = vunpack.c.l.b16 %v99
    %v199 = vunpack.c.h.b16 %v99
    %v200 = vunpack.c.l.b16 %v100
    %v201 = vunpack.c.h.b16 %v100
    %v202 = vunpack.c.l.b16 %v101
    %v203 = vunpack.c.h.b16 %v101
    %v204 = vunpack.c.l.b16 %v102
    %v205 = vunpack.c.h.b16 %v102
    %v206 = vpack.c.b16 %v146, %v142
    %v207 = vpack.c.b16 %v147, %v143
    %v208 = vpack.c.b16 %v148, %v144
    %v209 = vpack.c.b16 %v149, %v145
    %v210 = vpack.c.b16 %v154, %v150
    %v211 = vpack.c.b16 %v155, %v151
    %v212 = vpack.c.b16 %v156, %v152
    %v213 = vpack.c.b16 %v157, %v153
    %v214 = vpack.c.b16 %v162, %v158
    %v215 = vpack.c.b16 %v163, %v159
    %v216 = vpack.c.b16 %v164, %v160
    %v217 = vpack.c.b16 %v165, %v161
    %v218 = vpack.c.b16 %v170, %v166
    %v219 = vpack.c.b16 %v171, %v167
    %v220 = vpack.c.b16 %v172, %v168
    %v221 = vpack.c.b16 %v173, %v169
    %v222 = vpack.c.b16 %v178, %v174
    %v223 = vpack.c.b16 %v179, %v175
    %v224 = vpack.c.b16 %v180, %v176
    %v225 = vpack.c.b16 %v181, %v177
    %v226 = vpack.c.b16 %v186, %v182
    %v227 = vpack.c.b16 %v187, %v183
    %v228 = vpack.c.b16 %v188, %v184
    %v229 = vpack.c.b16 %v189, %v185
    %v230 = vpack.c.b16 %v194, %v190
    %v231 = vpack.c.b16 %v195, %v191
    %v232 = vpack.c.b16 %v196, %v192
    %v233 = vpack.c.b16 %v197, %v193
    %v234 = vpack.c.b16 %v202, %v198
    %v235 = vpack.c.b16 %v203, %v199
    %v236 = vpack.c.b16 %v204, %v200
    %v237 = vpack.c.b16 %v205, %v201
    %270 = vmatprep.subr.bf16.mxu0 %v207
    %271 = vmatpush1.bf16.xpose.msra.mxu0 %v206
    %272 = vmatprep.subr.bf16.mxu0 %v211
    %273 = vmatpush1.bf16.xpose.msra.mxu0 %v210
    %274 = vmatprep.subr.bf16.mxu0 %v215
    %275 = vmatpush1.bf16.xpose.msra.mxu0 %v214
    %276 = vmatprep.subr.bf16.mxu0 %v219
    %277 = vmatpush1.bf16.xpose.msra.mxu0 %v218
    %278 = vmatprep.subr.bf16.mxu0 %v223
    %279 = vmatpush1.bf16.xpose.msra.mxu0 %v222
    %280 = vmatprep.subr.bf16.mxu0 %v227
    %281 = vmatpush1.bf16.xpose.msra.mxu0 %v226
    %282 = vmatprep.subr.bf16.mxu0 %v231
    %283 = vmatpush1.bf16.xpose.msra.mxu0 %v230
    %284 = vmatprep.subr.bf16.mxu0 %v235
    %285 = vmatpush1.bf16.xpose.msra.mxu0 %v234
    %286 = vmatprep.subr.bf16.mxu0 0
    %287 = vmatpush1.bf16.xpose.msra.mxu0 0
    %288 = vmatprep.subr.bf16.mxu0 0
    %289 = vmatpush1.bf16.xpose.msra.mxu0 0
    %290 = vmatprep.subr.bf16.mxu0 0
    %291 = vmatpush1.bf16.xpose.msra.mxu0 0
    %292 = vmatprep.subr.bf16.mxu0 0
    %293 = vmatpush1.bf16.xpose.msra.mxu0 0
    %294 = vmatprep.subr.bf16.mxu0 0
    %295 = vmatpush1.bf16.xpose.msra.mxu0 0
    %296 = vmatprep.subr.bf16.mxu0 0
    %297 = vmatpush1.bf16.xpose.msra.mxu0 0
    %298 = vmatprep.subr.bf16.mxu0 0
    %299 = vmatpush1.bf16.xpose.msra.mxu0 0
    %300 = vmatprep.subr.bf16.mxu0 0
    %301 = vmatpush1.bf16.xpose.msra.mxu0 0
    %302 = vmatprep.mubr.bf16.mxu0 %v68
    %303 = vmatmul.mubr.bf16.gmra.mrb[0].mxu0 %v67
    %v304 = vpop.f32.mrb[0].mxu0
    %v305 = vadd.f32 %v108, %v304
    %v306 = vpop.f32.mrb[0].mxu0
    %v307 = vpop.f32.mrb[0].mxu0
    %v308 = vpop.f32.mrb[0].mxu0
    %309 = vdwg.mxu0
    %310 = vmatprep.subr.bf16.mxu0 %v209
    %311 = vmatpush1.bf16.xpose.msra.mxu0 %v208
    %312 = vmatprep.subr.bf16.mxu0 %v213
    %313 = vmatpush1.bf16.xpose.msra.mxu0 %v212
    %314 = vmatprep.subr.bf16.mxu0 %v217
    %315 = vmatpush1.bf16.xpose.msra.mxu0 %v216
    %316 = vmatprep.subr.bf16.mxu0 %v221
    %317 = vmatpush1.bf16.xpose.msra.mxu0 %v220
    %318 = vmatprep.subr.bf16.mxu0 %v225
    %319 = vmatpush1.bf16.xpose.msra.mxu0 %v224
    %320 = vmatprep.subr.bf16.mxu0 %v229
    %321 = vmatpush1.bf16.xpose.msra.mxu0 %v228
    %322 = vmatprep.subr.bf16.mxu0 %v233
    %323 = vmatpush1.bf16.xpose.msra.mxu0 %v232
    %324 = vmatprep.subr.bf16.mxu0 %v237
    %325 = vmatpush1.bf16.xpose.msra.mxu0 %v236
    %326 = vmatprep.subr.bf16.mxu0 0
    %327 = vmatpush1.bf16.xpose.msra.mxu0 0
    %328 = vmatprep.subr.bf16.mxu0 0
    %329 = vmatpush1.bf16.xpose.msra.mxu0 0
    %330 = vmatprep.subr.bf16.mxu0 0
    %331 = vmatpush1.bf16.xpose.msra.mxu0 0
    %332 = vmatprep.subr.bf16.mxu0 0
    %333 = vmatpush1.bf16.xpose.msra.mxu0 0
    %334 = vmatprep.subr.bf16.mxu0 0
    %335 = vmatpush1.bf16.xpose.msra.mxu0 0
    %336 = vmatprep.subr.bf16.mxu0 0
    %337 = vmatpush1.bf16.xpose.msra.mxu0 0
    %338 = vmatprep.subr.bf16.mxu0 0
    %339 = vmatpush1.bf16.xpose.msra.mxu0 0
    %340 = vmatprep.subr.bf16.mxu0 0
    %341 = vmatpush1.bf16.xpose.msra.mxu0 0
    %342 = vmatprep.mubr.bf16.mxu0 %v70
    %343 = vmatmul.mubr.bf16.gmra.mrb[0].mxu0 %v69
    %v344 = vpop.f32.mrb[0].mxu0
    %v345 = vadd.f32 %v305, %v344
    %v346 = vpop.f32.mrb[0].mxu0
    %v347 = vpop.f32.mrb[0].mxu0
    %v348 = vpop.f32.mrb[0].mxu0
    %349 = vdwg.mxu0
    %350 = vst [vmem:[#allocation8] sm:$0xff] %v345
    %v351 = vlaneseq
    %v352 = vand.u32 %v351, 127
    %vm353 = vcmp.lt.s32.totalorder %v352, 16
    %v354 = vsel %vm353, %v345, -1e+30
    %355 = vmax.xlane.f32.xlu0 %v354
    %v356 = vpop.xlane.xlu0 %355
    %v357 = vsub.f32 %v354, %v356
    %v358 = vmul.f32 %v357, 1.442695
    %v359 = vpow.pop %v358
    %360 = vadd.xlane.f32.xlu0 %v359
    %v361 = vpop.xlane.xlu0 %360
    %v362 = vlog2.pop %v361
    %v363 = vmul.f32 %v362, 0.6931472
    %v364 = vsub.f32 %v357, %v363
    %v365 = vld [vmem:[%s4] sm:$0xff]
    %366 = vset.pattern.permute.xlu0 0
    %367 = vperm.xlu0 %366, %v365
    %v368 = vpop.permute.xlu0 %367
    %vm369 = vcmp.eq.s32.totalorder %v352, %v368
    %v370 = vsel %vm369, 1, 0
    %v371 = vcvt.s32.f32 %v370
    %v372 = vld [vmem:[#allocation7] sm:$0xff]
    %v373 = vld [vmem:[#allocation7 + $0x8] sm:$0xff]
    %v374 = vld [vmem:[#allocation7 + $0x10] sm:$0xff]
    %v375 = vld [vmem:[#allocation7 + $0x18] sm:$0xff]
    %v376 = vld [vmem:[#allocation7 + $0x20] sm:$0xff]
    %v377 = vld [vmem:[#allocation7 + $0x28] sm:$0xff]
    %v378 = vld [vmem:[#allocation7 + $0x30] sm:$0xff]
    %v379 = vld [vmem:[#allocation7 + $0x38] sm:$0xff]
    %v380 = vld [vmem:[#allocation7 + $0x40] sm:$0xff]
    %v381 = vld [vmem:[#allocation7 + $0x48] sm:$0xff]
    %v382 = vld [vmem:[#allocation7 + $0x50] sm:$0xff]
    %v383 = vld [vmem:[#allocation7 + $0x58] sm:$0xff]
    %v384 = vld [vmem:[#allocation7 + $0x60] sm:$0xff]
    %v385 = vld [vmem:[#allocation7 + $0x68] sm:$0xff]
    %v386 = vld [vmem:[#allocation7 + $0x70] sm:$0xff]
    %v387 = vld [vmem:[#allocation7 + $0x78] sm:$0xff]
    %388 = vmatprep.subr.mxu0 0.0
    %389 = vmatpush1.msra.mxu0 %v372
    %390 = vmatprep.subr.mxu0 0.0
    %391 = vmatpush1.msra.mxu0 %v373
    %392 = vmatprep.subr.mxu0 0.0
    %393 = vmatpush1.msra.mxu0 %v374
    %394 = vmatprep.subr.mxu0 0.0
    %395 = vmatpush1.msra.mxu0 %v375
    %396 = vmatprep.subr.mxu0 0.0
    %397 = vmatpush1.msra.mxu0 %v376
    %398 = vmatprep.subr.mxu0 0.0
    %399 = vmatpush1.msra.mxu0 %v377
    %400 = vmatprep.subr.mxu0 0.0
    %401 = vmatpush1.msra.mxu0 %v378
    %402 = vmatprep.subr.mxu0 0.0
    %403 = vmatpush1.msra.mxu0 %v379
    %404 = vmatprep.subr.mxu0 0.0
    %405 = vmatpush1.msra.mxu0 %v380
    %406 = vmatprep.subr.mxu0 0.0
    %407 = vmatpush1.msra.mxu0 %v381
    %408 = vmatprep.subr.mxu0 0.0
    %409 = vmatpush1.msra.mxu0 %v382
    %410 = vmatprep.subr.mxu0 0.0
    %411 = vmatpush1.msra.mxu0 %v383
    %412 = vmatprep.subr.mxu0 0.0
    %413 = vmatpush1.msra.mxu0 %v384
    %414 = vmatprep.subr.mxu0 0.0
    %415 = vmatpush1.msra.mxu0 %v385
    %416 = vmatprep.subr.mxu0 0.0
    %417 = vmatpush1.msra.mxu0 %v386
    %418 = vmatprep.subr.mxu0 0.0
    %419 = vmatpush1.msra.mxu0 %v387
    %420 = vmatprep.subr.mxu0 0.0
    %421 = vmatpush1.msra.mxu0 0.0
    %422 = vmatprep.subr.mxu0 0.0
    %423 = vmatpush1.msra.mxu0 0.0
    %424 = vmatprep.subr.mxu0 0.0
    %425 = vmatpush1.msra.mxu0 0.0
    %426 = vmatprep.subr.mxu0 0.0
    %427 = vmatpush1.msra.mxu0 0.0
    %428 = vmatprep.subr.mxu0 0.0
    %429 = vmatpush1.msra.mxu0 0.0
    %430 = vmatprep.subr.mxu0 0.0
    %431 = vmatpush1.msra.mxu0 0.0
    %432 = vmatprep.subr.mxu0 0.0
    %433 = vmatpush1.msra.mxu0 0.0
    %434 = vmatprep.subr.mxu0 0.0
    %435 = vmatpush1.msra.mxu0 0.0
    %436 = vmatprep.subr.mxu0 0.0
    %437 = vmatpush1.msra.mxu0 0.0
    %438 = vmatprep.subr.mxu0 0.0
    %439 = vmatpush1.msra.mxu0 0.0
    %440 = vmatprep.subr.mxu0 0.0
    %441 = vmatpush1.msra.mxu0 0.0
    %442 = vmatprep.subr.mxu0 0.0
    %443 = vmatpush1.msra.mxu0 0.0
    %444 = vmatprep.subr.mxu0 0.0
    %445 = vmatpush1.msra.mxu0 0.0
    %446 = vmatprep.subr.mxu0 0.0
    %447 = vmatpush1.msra.mxu0 0.0
    %448 = vmatprep.subr.mxu0 0.0
    %449 = vmatpush1.msra.mxu0 0.0
    %450 = vmatprep.subr.mxu0 0.0
    %451 = vmatpush1.msra.mxu0 0.0
    %452 = vmatprep.mubr.f32.mxu0 0.0
    %453 = vmatmul.mubr.f32.gmra.mrb[0].mxu0 %v371
    %v454 = vpop.f32.mrb[0].mxu0
    %v455 = vadd.f32 0.0, %v454
    %v456 = vpop.f32.mrb[0].mxu0
    %457 = vdwg.mxu0
    %v458 = vmul.f32 %v364, %v455
    %459 = vadd.xlane.f32.xlu0 %v458
    %v460 = vpop.xlane.xlu0 %459
    %s461 = smul.u32 0, 8
    %v462 = vlaneseq
    %v463 = vshrl.u32 %v462, 7
    %v464 = vstv %s461
    %v465 = vadd.s32 %v464, %v463
    %vm466 = vcmp.lt.s32.totalorder %v465, 4
    %v467 = vsel %vm466, %v460, 0.0
    %vm468 = vcmask 7168
    %469 = vst.msk [vmem:[%s6] sm:$0xff] %vm468, %v467
    // Predicated region
    $region34: #{tpu_custom_call.1} parent=1 // pred_check
      _
    $region35: #{tpu_custom_call.1} parent=1 // pred_check_branch
      %471 = sbr.rel (0) target = $region37
    $region36: #{tpu_custom_call.1} parent=1 // pred_region
      %s473 = ssub.s32 128, 128
      %474 = vsyncadd [#allocation4], %s473
      %s476 = sshll.u32 [#allocation8], 4
      %s477 = int_to_ptr.vmem [resolvable:$true] %s476
      %479 = dma.vmem_to_hbm [thread:$0]  %s477, 128, %s5, [#allocation4]
    $region37: #{tpu_custom_call.1} parent=1 // pred_fallthru
      _
    // Predicated region
    $region38: #{tpu_custom_call.1} parent=1 // pred_check
      _
    $region39: #{tpu_custom_call.1} parent=1 // pred_check_branch
      %481 = sbr.rel (0) target = $region41
    $region40: #{tpu_custom_call.1} parent=1 // pred_region
      _
    $region41: #{tpu_custom_call.1} parent=1 // pred_fallthru
      _
    // Predicated region
    $region42: #{tpu_custom_call.1} parent=1 // pred_check
      _
    $region43: #{tpu_custom_call.1} parent=1 // pred_check_branch
      %483 = sbr.rel (0) target = $region45
    $region44: #{tpu_custom_call.1} parent=1 // pred_region
      %484 = dma.done [#allocation4], 128
    $region45: #{tpu_custom_call.1} parent=1 // pred_fallthru
      _
    // Predicated region
    $region46: #{tpu_custom_call.1} parent=1 // pred_check
      _
    $region47: #{tpu_custom_call.1} parent=1 // pred_check_branch
      %486 = sbr.rel (0) target = $region49
    $region48: #{tpu_custom_call.1} parent=1 // pred_region
      _
    $region49: #{tpu_custom_call.1} parent=1 // pred_fallthru
      _
    %487 = vsyncpa [#allocation3], 1
    %488 = vsyncpa [#allocation6], 1
    %489 = vsyncpa [#allocation4], 1

</llo_original>
